<compile_context>
chip_gen: v7x
topology: tpu7x:2x2x1
jax: 0.10.0
libtpu: 0.0.40
codegen_flags: <defaults>
</compile_context>

<pallas_src>
import functools

import jax
import jax.numpy as jnp
from jax.experimental import pallas as pl
from jax.experimental.pallas import tpu as pltpu

GAMMA = 0.1
_LANE = 512            # lane-dense tile width (multiple of 128)
_MAX_TILE_ROWS = 1024  # 1024 x 512 x 4 B = 2 MiB per input tile


def _f32(x):
    return x if x.dtype == jnp.float32 else x.astype(jnp.float32)


def _idec_loss_kernel(pred_cl_ref, targ_cl_ref, pred_rec_ref, targ_rec_ref,
                      out_ref, acc_ref, *, inv_batch, inv_n, gamma):
    i = pl.program_id(0)

    # --- KL-divergence (batchmean) term: tiny (B, K) block, computed once ---
    @pl.when(i == 0)
    def _():
        t = _f32(targ_cl_ref[...])
        p = _f32(pred_cl_ref[...])
        safe_t = jnp.where(t > 0, t, 1.0)
        xlogy = jnp.where(t > 0, t * jnp.log(safe_t), 0.0)  # xlogy(t, t)
        kl_sum = jnp.sum(xlogy - t * p)
        acc_ref[0] = jnp.float32(gamma * inv_batch) * kl_sum

    # --- streaming MSE partial for this tile (zero padding contributes 0) ---
    d = _f32(pred_rec_ref[...]) - _f32(targ_rec_ref[...])
    acc_ref[0] += jnp.sum(d * d) * jnp.float32(inv_n)

    # --- finalize on the last grid step ---
    @pl.when(i == pl.num_programs(0) - 1)
    def _():
        out_ref[0, 0] = acc_ref[0]


def idec_loss(pred_cl, targ_cl, pred_rec, targ_rec, gamma=GAMMA,
              max_tile_rows=_MAX_TILE_ROWS):
    """pred_cl/targ_cl: (B, K); pred_rec/targ_rec: any shape (e.g. NCHW)."""
    B, K = pred_cl.shape
    n_rec = 1
    for s in pred_rec.shape:
        n_rec *= s

    # Flatten the reconstruction tensors and reshape them to a lane-dense
    # (rows, _LANE) slab.  Zero-pad the tail so the block shape divides evenly;
    # zeros in BOTH tensors contribute nothing to sum((p - t)^2).
    lane = _LANE
    rows = -(-n_rec // lane)
    max_tile_rows = max(8, (max_tile_rows // 8) * 8)
    if rows >= max_tile_rows:
        tile_rows = max_tile_rows
    else:
        tile_rows = ((rows + 7) // 8) * 8
    rows_pad = -(-rows // tile_rows) * tile_rows
    pad = rows_pad * lane - n_rec

    flat_p = pred_rec.reshape(-1)
    flat_t = targ_rec.reshape(-1)
    if pad:
        flat_p = jnp.pad(flat_p, (0, pad))
        flat_t = jnp.pad(flat_t, (0, pad))
    pred_2d = flat_p.reshape(rows_pad, lane)
    targ_2d = flat_t.reshape(rows_pad, lane)

    grid = (rows_pad // tile_rows,)

    kernel = functools.partial(
        _idec_loss_kernel,
        inv_batch=1.0 / B, inv_n=1.0 / n_rec, gamma=float(gamma))

    rec_bytes = jnp.dtype(pred_rec.dtype).itemsize
    cl_bytes = jnp.dtype(pred_cl.dtype).itemsize
    cost = pl.CostEstimate(
        flops=3 * n_rec + 6 * B * K,
        transcendentals=B * K,
        bytes_accessed=(pred_2d.size + targ_2d.size) * rec_bytes
                       + 2 * B * K * cl_bytes + 4,
    )

    out = pl.pallas_call(
        kernel,
        out_shape=jax.ShapeDtypeStruct((1, 1), jnp.float32),
        grid=grid,
        in_specs=[
            pl.BlockSpec((B, K), lambda i: (0, 0)),              # pred_cl (resident)
            pl.BlockSpec((B, K), lambda i: (0, 0)),              # targ_cl (resident)
            pl.BlockSpec((tile_rows, lane), lambda i: (i, 0)),   # pred_rec tile
            pl.BlockSpec((tile_rows, lane), lambda i: (i, 0)),   # targ_rec tile
        ],
        out_specs=pl.BlockSpec(memory_space=pltpu.SMEM),
        scratch_shapes=[pltpu.SMEM((1,), jnp.float32)],
        compiler_params=pltpu.CompilerParams(
            dimension_semantics=("arbitrary",)),
        cost_estimate=cost,
    )(pred_cl, targ_cl, pred_2d, targ_2d)
    return out[0, 0]


def _reference(pred_cl, targ_cl, pred_rec, targ_rec, gamma=GAMMA):
    B = pred_cl.shape[0]
    safe_t = jnp.where(targ_cl > 0, targ_cl, 1.0)
    kl = jnp.sum(jnp.where(targ_cl > 0, targ_cl * jnp.log(safe_t), 0.0)
                 - targ_cl * pred_cl) / B
    mse = jnp.mean((pred_rec - targ_rec) ** 2)
    return mse + gamma * kl


def _make_case(key, B, K, C, H, W):
    k1, k2, k3, k4 = jax.random.split(key, 4)
    pred_cl = jax.nn.log_softmax(
        jax.random.normal(k1, (B, K), dtype=jnp.float32), axis=-1)
    targ_cl = jax.nn.softmax(
        jax.random.normal(k2, (B, K), dtype=jnp.float32), axis=-1)
    pred_rec = jax.random.normal(k3, (B, C, H, W), dtype=jnp.float32)
    targ_rec = jax.random.normal(k4, (B, C, H, W), dtype=jnp.float32)
    return pred_cl, targ_cl, pred_rec, targ_rec


if __name__ == "__main__":
    root = jax.random.PRNGKey(0)
    keys = jax.random.split(root, 3)

    # Case 1: aligned shapes, single tile.
    args = _make_case(keys[0], B=8, K=16, C=4, H=16, W=16)
    loss = idec_loss(*args)
    jax.block_until_ready(loss)
    ref = _reference(*args)
    assert jnp.allclose(loss, ref, rtol=1e-5, atol=1e-6), (loss, ref)

    # Case 2: unaligned shapes -> exercises the zero-padding tail path.
    args = _make_case(keys[1], B=2, K=10, C=3, H=15, W=15)
    loss = idec_loss(*args)
    jax.block_until_ready(loss)
    ref = _reference(*args)
    assert jnp.allclose(loss, ref, rtol=1e-5, atol=1e-6), (loss, ref)

    # Case 3: small max_tile_rows -> exercises multi-step grid accumulation.
    args = _make_case(keys[2], B=4, K=12, C=4, H=32, W=32)
    loss = idec_loss(*args, max_tile_rows=8)
    jax.block_until_ready(loss)
    ref = _reference(*args)
    assert jnp.allclose(loss, ref, rtol=1e-5, atol=1e-6), (loss, ref)

    print("KERNEL_OK")
</pallas_src>

<mosaic_0001>
module attributes {stable_mosaic.version = 11 : i64} {
  func.func @_idec_loss_kernel(%arg0: i32, %arg1: memref<8x16xf32, #tpu.memory_space<vmem>>, %arg2: memref<8x16xf32, #tpu.memory_space<vmem>>, %arg3: memref<16x512xf32, #tpu.memory_space<vmem>>, %arg4: memref<16x512xf32, #tpu.memory_space<vmem>>, %arg5: memref<1x1xf32, #tpu.memory_space<smem>>, %arg6: memref<1xf32, #tpu.memory_space<smem>>) attributes {dimension_semantics = [#tpu.dimension_semantics<arbitrary>], iteration_bounds = array<i64: 1>, scalar_prefetch = 0 : i64, scratch_operands = 1 : i64, tpu.core_type = #tpu.core_type<tc>, window_params = [{pipeline_mode = #tpu.pipeline_mode<synchronous>, transform_indices = @transform_0, window_bounds = array<i64: 8, 16>}, {pipeline_mode = #tpu.pipeline_mode<synchronous>, transform_indices = @transform_1, window_bounds = array<i64: 8, 16>}, {transform_indices = @transform_2, window_bounds = array<i64: 16, 512>}, {transform_indices = @transform_3, window_bounds = array<i64: 16, 512>}, {transform_indices = @transform_4, window_bounds = array<i64: 1, 1>}]} {
    %c0_i32 = arith.constant 0 : i32
    %0 = arith.cmpi eq, %arg0, %c0_i32 : i32
    %1 = arith.extui %0 : i1 to i32
    %c0_i32_0 = arith.constant 0 : i32
    %2 = arith.cmpi ne, %1, %c0_i32_0 : i32
    scf.if %2 {
      %c0_9 = arith.constant 0 : index
      %c0_10 = arith.constant 0 : index
      %18 = vector.load %arg2[%c0_9, %c0_10] : memref<8x16xf32, #tpu.memory_space<vmem>>, vector<8x16xf32>
      %c0_11 = arith.constant 0 : index
      %c0_12 = arith.constant 0 : index
      %19 = vector.load %arg1[%c0_11, %c0_12] : memref<8x16xf32, #tpu.memory_space<vmem>>, vector<8x16xf32>
      %cst_13 = arith.constant 0.000000e+00 : f32
      %20 = vector.broadcast %cst_13 : f32 to vector<8x16xf32>
      %21 = arith.cmpf ogt, %18, %20 : vector<8x16xf32>
      %cst_14 = arith.constant 1.000000e+00 : f32
      %22 = vector.broadcast %cst_14 : f32 to vector<8x16xf32>
      %23 = arith.select %21, %18, %22 : vector<8x16xi1>, vector<8x16xf32>
      %cst_15 = arith.constant 0.000000e+00 : f32
      %24 = vector.broadcast %cst_15 : f32 to vector<8x16xf32>
      %25 = arith.cmpf ogt, %18, %24 : vector<8x16xf32>
      %26 = math.log %23 : vector<8x16xf32>
      %27 = arith.mulf %18, %26 : vector<8x16xf32>
      %cst_16 = arith.constant 0.000000e+00 : f32
      %28 = vector.broadcast %cst_16 : f32 to vector<8x16xf32>
      %29 = arith.select %25, %27, %28 : vector<8x16xi1>, vector<8x16xf32>
      %30 = arith.mulf %18, %19 : vector<8x16xf32>
      %31 = arith.subf %29, %30 : vector<8x16xf32>
      %32 = vector.shape_cast %31 : vector<8x16xf32> to vector<1x8x16xf32>
      %cst_17 = arith.constant dense<0.000000e+00> : vector<1xf32>
      %33 = vector.multi_reduction <add>, %32, %cst_17 [1, 2] : vector<1x8x16xf32> to vector<1xf32>
      %34 = vector.shape_cast %33 : vector<1xf32> to vector<1x1x1xf32>
      %35 = vector.extract %34[0, 0, 0] : f32 from vector<1x1x1xf32>
      %cst_18 = arith.constant 1.250000e-02 : f32
      %36 = arith.mulf %cst_18, %35 : f32
      %c0_19 = arith.constant 0 : index
      %37 = memref.load %arg6[%c0_19] : memref<1xf32, #tpu.memory_space<smem>>
      memref.store %36, %arg6[%c0_19] : memref<1xf32, #tpu.memory_space<smem>>
    } else {
    }
    %c0 = arith.constant 0 : index
    %c0_1 = arith.constant 0 : index
    %3 = vector.load %arg3[%c0, %c0_1] : memref<16x512xf32, #tpu.memory_space<vmem>>, vector<16x512xf32>
    %c0_2 = arith.constant 0 : index
    %c0_3 = arith.constant 0 : index
    %4 = vector.load %arg4[%c0_2, %c0_3] : memref<16x512xf32, #tpu.memory_space<vmem>>, vector<16x512xf32>
    %5 = arith.subf %3, %4 : vector<16x512xf32>
    %c0_4 = arith.constant 0 : index
    %6 = memref.load %arg6[%c0_4] : memref<1xf32, #tpu.memory_space<smem>>
    %7 = arith.mulf %5, %5 : vector<16x512xf32>
    %8 = vector.shape_cast %7 : vector<16x512xf32> to vector<1x16x512xf32>
    %cst = arith.constant dense<0.000000e+00> : vector<1xf32>
    %9 = vector.multi_reduction <add>, %8, %cst [1, 2] : vector<1x16x512xf32> to vector<1xf32>
    %10 = vector.shape_cast %9 : vector<1xf32> to vector<1x1x1xf32>
    %11 = vector.extract %10[0, 0, 0] : f32 from vector<1x1x1xf32>
    %cst_5 = arith.constant 1.22070313E-4 : f32
    %12 = arith.mulf %11, %cst_5 : f32
    %13 = arith.addf %6, %12 : f32
    %c0_6 = arith.constant 0 : index
    %14 = memref.load %arg6[%c0_6] : memref<1xf32, #tpu.memory_space<smem>>
    memref.store %13, %arg6[%c0_6] : memref<1xf32, #tpu.memory_space<smem>>
    %c0_i32_7 = arith.constant 0 : i32
    %15 = arith.cmpi eq, %arg0, %c0_i32_7 : i32
    %16 = arith.extui %15 : i1 to i32
    %c0_i32_8 = arith.constant 0 : i32
    %17 = arith.cmpi ne, %16, %c0_i32_8 : i32
    scf.if %17 {
      %c0_9 = arith.constant 0 : index
      %18 = memref.load %arg6[%c0_9] : memref<1xf32, #tpu.memory_space<smem>>
      %c0_10 = arith.constant 0 : index
      %c0_11 = arith.constant 0 : index
      %19 = memref.load %arg5[%c0_10, %c0_11] : memref<1x1xf32, #tpu.memory_space<smem>>
      memref.store %18, %arg5[%c0_10, %c0_11] : memref<1x1xf32, #tpu.memory_space<smem>>
    } else {
    }
    return
  }
  func.func @transform_0(%arg0: i32) -> (i32, i32) {
    %c0_i32 = arith.constant 0 : i32
    %c0_i32_0 = arith.constant 0 : i32
    %c0_i32_1 = arith.constant 0 : i32
    return %c0_i32, %c0_i32_0 : i32, i32
  }
  func.func @transform_1(%arg0: i32) -> (i32, i32) {
    %c0_i32 = arith.constant 0 : i32
    %c0_i32_0 = arith.constant 0 : i32
    %c0_i32_1 = arith.constant 0 : i32
    return %c0_i32, %c0_i32_0 : i32, i32
  }
  func.func @transform_2(%arg0: i32) -> (i32, i32) {
    %c0_i32 = arith.constant 0 : i32
    %c0_i32_0 = arith.constant 0 : i32
    return %arg0, %c0_i32 : i32, i32
  }
  func.func @transform_3(%arg0: i32) -> (i32, i32) {
    %c0_i32 = arith.constant 0 : i32
    %c0_i32_0 = arith.constant 0 : i32
    return %arg0, %c0_i32 : i32, i32
  }
  func.func @transform_4(%arg0: i32) -> (i32, i32) {
    %c0_i32 = arith.constant 0 : i32
    %c0_i32_0 = arith.constant 0 : i32
    %c0_i32_1 = arith.constant 0 : i32
    return %c0_i32, %c0_i32_0 : i32, i32
  }
}

</mosaic_0001>

<llo_original>
// kernel: tpu_custom_call.1
$region0: #{tpu_custom_call.1}
  #allocation0 [shape = 'u32[]', space=smem, size = 0x4, offset = 0x4, fixed_abs, tag = 'smem constant byte address 0x4 - core index']
  #allocation1 [shape = 'u32[144,128]{1,0:T(1,128)}', space=vmem, size = 0x12000, scoped, tag = 'internal scratch']
  #allocation2 [shape = 'f32[1]{0:T(128)}', space=smem, size = 0x200, scoped, tag = 'scratch operand']
  %s0 = inlined_call_operand.hbm [shape: f32[8,16], index: 0, kind: input, shape index: {}]
  %s1 = inlined_call_operand.hbm [shape: f32[8,16], index: 1, kind: input, shape index: {}]
  %s2 = inlined_call_operand.hbm [shape: f32[16,512], index: 2, kind: input, shape index: {}]
  %s3 = inlined_call_operand.hbm [shape: f32[16,512], index: 3, kind: input, shape index: {}]
  %s4 = inlined_call_operand.hbm [shape: f32[1,1], index: 4, kind: output, shape index: {}]
  %s5 = sld [smem:[#allocation0]]
  $region50: #{tpu_custom_call.1} parent=0
    _
  %s7 = ssub.s32 1, %s5
  %s8 = scalar_select 0, %s7, %s5
  $region1: #{tpu_custom_call.1} parent=0
    #allocation3 [shape = 'u8[4096]{0}', space=vmem, size = 0x1000, scoped, tag = 'input window, operand 0, single buffered']
    #allocation4 [shape = 's32[1]{0}', space=sflag, size = 0x4, scoped, tag = 'scoped memory for tpu_custom_call.1']
    #allocation5 [shape = 's32[1]{0}', space=sflag, size = 0x4, scoped, tag = 'scoped memory for tpu_custom_call.1']
    #allocation6 [shape = 'u8[4096]{0}', space=vmem, size = 0x1000, scoped, tag = 'input window, operand 1, single buffered']
    #allocation7 [shape = 's32[1]{0}', space=sflag, size = 0x4, scoped, tag = 'scoped memory for tpu_custom_call.1']
    #allocation8 [shape = 'u8[32768]{0}', space=vmem, size = 0x8000, scoped, tag = 'input window, operand 2, single buffered']
    #allocation9 [shape = 'u8[32768]{0}', space=vmem, size = 0x8000, scoped, tag = 'input window, operand 3, single buffered']
    #allocation10 [shape = 's32[1]{0}', space=sflag, size = 0x4, scoped, tag = 'scoped memory for tpu_custom_call.1']
    #allocation11 [shape = 'u8[512]{0}', space=smem, size = 0x200, scoped, tag = 'output window, operand 0, single buffered']
    %9 = vsyncpa [#allocation4], 0
    %10 = vsyncpa [#allocation7], 0
    %11 = vsyncpa [#allocation10], 0
    %12 = vsyncpa [#allocation5], 0
    // Predicated region
    $region2: #{tpu_custom_call.1} parent=1 // pred_check
      _
    $region3: #{tpu_custom_call.1} parent=1 // pred_check_branch
      %14 = sbr.rel (0) target = $region5
    $region4: #{tpu_custom_call.1} parent=1 // pred_region
      %s16 = ssub.s32 128, 128
      %17 = vsyncadd [#allocation4], %s16
      %s19 = sshll.u32 [#allocation3], 4
      %s20 = int_to_ptr.vmem [resolvable:$true] %s19
      %22 = dma.hbm_to_vmem [thread:$0]  %s0, 128, %s20, [#allocation4]
    $region5: #{tpu_custom_call.1} parent=1 // pred_fallthru
      _
    // Predicated region
    $region6: #{tpu_custom_call.1} parent=1 // pred_check
      _
    $region7: #{tpu_custom_call.1} parent=1 // pred_check_branch
      %24 = sbr.rel (0) target = $region9
    $region8: #{tpu_custom_call.1} parent=1 // pred_region
      %s26 = ssub.s32 128, 128
      %27 = vsyncadd [#allocation7], %s26
      %s29 = sshll.u32 [#allocation6], 4
      %s30 = int_to_ptr.vmem [resolvable:$true] %s29
      %32 = dma.hbm_to_vmem [thread:$0]  %s1, 128, %s30, [#allocation7]
    $region9: #{tpu_custom_call.1} parent=1 // pred_fallthru
      _
    // Predicated region
    $region10: #{tpu_custom_call.1} parent=1 // pred_check
      _
    $region11: #{tpu_custom_call.1} parent=1 // pred_check_branch
      %34 = sbr.rel (0) target = $region13
    $region12: #{tpu_custom_call.1} parent=1 // pred_region
      %s36 = ssub.s32 1024, 1024
      %37 = vsyncadd [#allocation7], %s36
      %s38 = sshll.u32 [#allocation8], 4
      %s39 = int_to_ptr.vmem [resolvable:$true] %s38
      %44 = dma.hbm_to_vmem [thread:$0]  %s2, 1024, %s39, [#allocation7], 512, 512, 32
    $region13: #{tpu_custom_call.1} parent=1 // pred_fallthru
      _
    // Predicated region
    $region14: #{tpu_custom_call.1} parent=1 // pred_check
      _
    $region15: #{tpu_custom_call.1} parent=1 // pred_check_branch
      %46 = sbr.rel (0) target = $region17
    $region16: #{tpu_custom_call.1} parent=1 // pred_region
      %s48 = ssub.s32 1024, 1024
      %49 = vsyncadd [#allocation10], %s48
      %s50 = sshll.u32 [#allocation9], 4
      %s51 = int_to_ptr.vmem [resolvable:$true] %s50
      %56 = dma.hbm_to_vmem [thread:$0]  %s3, 1024, %s51, [#allocation10], 512, 512, 32
    $region17: #{tpu_custom_call.1} parent=1 // pred_fallthru
      _
    // Predicated region
    $region18: #{tpu_custom_call.1} parent=1 // pred_check
      _
    $region19: #{tpu_custom_call.1} parent=1 // pred_check_branch
      %58 = sbr.rel (0) target = $region21
    $region20: #{tpu_custom_call.1} parent=1 // pred_region
      %59 = dma.done [#allocation4], 128
    $region21: #{tpu_custom_call.1} parent=1 // pred_fallthru
      _
    // Predicated region
    $region22: #{tpu_custom_call.1} parent=1 // pred_check
      _
    $region23: #{tpu_custom_call.1} parent=1 // pred_check_branch
      %61 = sbr.rel (0) target = $region25
    $region24: #{tpu_custom_call.1} parent=1 // pred_region
      %62 = dma.done [#allocation7], 128
    $region25: #{tpu_custom_call.1} parent=1 // pred_fallthru
      _
    // Predicated region
    $region26: #{tpu_custom_call.1} parent=1 // pred_check
      _
    $region27: #{tpu_custom_call.1} parent=1 // pred_check_branch
      %64 = sbr.rel (0) target = $region29
    $region28: #{tpu_custom_call.1} parent=1 // pred_region
      %65 = dma.done [#allocation7], 1024
    $region29: #{tpu_custom_call.1} parent=1 // pred_fallthru
      _
    // Predicated region
    $region30: #{tpu_custom_call.1} parent=1 // pred_check
      _
    $region31: #{tpu_custom_call.1} parent=1 // pred_check_branch
      %67 = sbr.rel (0) target = $region33
    $region32: #{tpu_custom_call.1} parent=1 // pred_region
      %68 = dma.done [#allocation10], 1024
    $region33: #{tpu_custom_call.1} parent=1 // pred_fallthru
      _
    %p69 = scmp.eq.s32.totalorder 0, 0
    // Predicated region
    $region34: #{tpu_custom_call.1} parent=1 // pred_check
      %p70 = pneg %p69
    $region35: #{tpu_custom_call.1} parent=1 // pred_check_branch
      %72 = sbr.rel (%p70) target = $region37
    $region36: #{tpu_custom_call.1} parent=1 // pred_region
      %v73 = vld [vmem:[#allocation6] sm:$0xff]
      %v74 = vld [vmem:[#allocation3] sm:$0xff]
      %vm75 = vcmp.gt.f32.partialorder %v73, 0.0
      %v76 = vsel %vm75, %v73, 1.0
      %v77 = vlog2.pop %v76
      %v78 = vmul.f32 %v77, 0.6931472
      %v79 = vmul.f32 %v73, %v78
      %v80 = vsel %vm75, %v79, 0.0
      %v81 = vmul.f32 %v73, %v74
      %v82 = vsub.f32 %v80, %v81
      %vm83 = vcmask 130048
      %v84 = vsel %vm83, %v82, 0.0
      %85 = vadd.xlane.f32.xlu0 %v84
      %v86 = vpop.xlane.xlu0 %85
      %v87 = vrot.slane %v86, 4
      %v88 = vadd.f32 %v86, %v87
      %v89 = vrot.slane %v88, 2
      %v90 = vadd.f32 %v88, %v89
      %v91 = vrot.slane %v90, 1
      %v92 = vadd.f32 %v90, %v91
      %s93 = vtos %v92
      %s94 = smul.f32 %s93, 0.0125
      %s95 = scalar_lea.smem [#allocation2], 0
      %96 = sst [smem:[%s95]] %s94
    $region37: #{tpu_custom_call.1} parent=1 // pred_fallthru
      _
    %v97 = vld [vmem:[#allocation8] sm:$0xff]
    %v98 = vld [vmem:[#allocation8 + $0x8] sm:$0xff]
    %v99 = vld [vmem:[#allocation8 + $0x10] sm:$0xff]
    %v100 = vld [vmem:[#allocation8 + $0x18] sm:$0xff]
    %v101 = vld [vmem:[#allocation8 + $0x20] sm:$0xff]
    %v102 = vld [vmem:[#allocation8 + $0x28] sm:$0xff]
    %v103 = vld [vmem:[#allocation8 + $0x30] sm:$0xff]
    %v104 = vld [vmem:[#allocation8 + $0x38] sm:$0xff]
    %v105 = vld [vmem:[#allocation9] sm:$0xff]
    %v106 = vld [vmem:[#allocation9 + $0x8] sm:$0xff]
    %v107 = vld [vmem:[#allocation9 + $0x10] sm:$0xff]
    %v108 = vld [vmem:[#allocation9 + $0x18] sm:$0xff]
    %v109 = vld [vmem:[#allocation9 + $0x20] sm:$0xff]
    %v110 = vld [vmem:[#allocation9 + $0x28] sm:$0xff]
    %v111 = vld [vmem:[#allocation9 + $0x30] sm:$0xff]
    %v112 = vld [vmem:[#allocation9 + $0x38] sm:$0xff]
    %v113 = vsub.f32 %v97, %v105
    %v114 = vsub.f32 %v98, %v106
    %v115 = vsub.f32 %v99, %v107
    %v116 = vsub.f32 %v100, %v108
    %v117 = vsub.f32 %v101, %v109
    %v118 = vsub.f32 %v102, %v110
    %v119 = vsub.f32 %v103, %v111
    %v120 = vsub.f32 %v104, %v112
    %s121 = sld [smem:[#allocation2]]
    %v122 = vmul.f32 %v113, %v113
    %v123 = vmul.f32 %v114, %v114
    %v124 = vmul.f32 %v115, %v115
    %v125 = vmul.f32 %v116, %v116
    %v126 = vmul.f32 %v117, %v117
    %v127 = vmul.f32 %v118, %v118
    %v128 = vmul.f32 %v119, %v119
    %v129 = vmul.f32 %v120, %v120
    %v130 = vadd.f32 %v122, %v123
    %v131 = vadd.f32 %v130, %v124
    %v132 = vadd.f32 %v131, %v125
    %v133 = vadd.f32 %v132, %v126
    %v134 = vadd.f32 %v133, %v127
    %v135 = vadd.f32 %v134, %v128
    %v136 = vadd.f32 %v135, %v129
    %137 = vadd.xlane.f32.xlu0 %v136
    %v138 = vpop.xlane.xlu0 %137
    %v139 = vrot.slane %v138, 4
    %v140 = vadd.f32 %v138, %v139
    %v141 = vrot.slane %v140, 2
    %v142 = vadd.f32 %v140, %v141
    %v143 = vrot.slane %v142, 1
    %v144 = vadd.f32 %v142, %v143
    %s145 = vtos %v144
    %s146 = smul.f32 %s145, 0.00012207031
    %s147 = sadd.f32 %s121, %s146
    %s148 = scalar_lea.smem [#allocation2], 0
    %149 = sst [smem:[%s148]] %s147
    // Predicated region
    $region38: #{tpu_custom_call.1} parent=1 // pred_check
      %p150 = pneg %p69
    $region39: #{tpu_custom_call.1} parent=1 // pred_check_branch
      %152 = sbr.rel (%p150) target = $region41
    $region40: #{tpu_custom_call.1} parent=1 // pred_region
      %s153 = sld [smem:[#allocation2]]
      %s154 = scalar_lea.smem [#allocation11], 0
      %155 = sst [smem:[%s154]] %s153
    $region41: #{tpu_custom_call.1} parent=1 // pred_fallthru
      _
    // Predicated region
    $region42: #{tpu_custom_call.1} parent=1 // pred_check
      _
    $region43: #{tpu_custom_call.1} parent=1 // pred_check_branch
      %157 = sbr.rel (0) target = $region45
    $region44: #{tpu_custom_call.1} parent=1 // pred_region
      %s159 = ssub.s32 16, 16
      %160 = vsyncadd [#allocation5], %s159
      %163 = dma.smem_to_hbm [#allocation11], 16, %s4, [#allocation5]
    $region45: #{tpu_custom_call.1} parent=1 // pred_fallthru
      _
    // Predicated region
    $region46: #{tpu_custom_call.1} parent=1 // pred_check
      _
    $region47: #{tpu_custom_call.1} parent=1 // pred_check_branch
      %165 = sbr.rel (0) target = $region49
    $region48: #{tpu_custom_call.1} parent=1 // pred_region
      %166 = dma.done [#allocation5], 16
    $region49: #{tpu_custom_call.1} parent=1 // pred_fallthru
      _
    %167 = sfence
    %168 = vsyncpa [#allocation4], 1
    %169 = vsyncpa [#allocation7], 1
    %170 = vsyncpa [#allocation10], 1
    %171 = vsyncpa [#allocation5], 1

</llo_original>
